<compile_context>
chip_gen: v5e
topology: v5e:2x2
jax: 0.10.0
libtpu: 0.0.40
codegen_flags: <defaults>
</compile_context>

<pallas_src>
import jax
import jax.numpy as jnp
import numpy as np
from jax import lax
from jax.experimental import pallas as pl
from jax.experimental.pallas import tpu as pltpu


def _make_kernel(H, W, C, C_in, C_hid, Bt, forward_dir, last_layer, mxu_dtype):
    """Fused conv + affine-coupling kernel for Bt batch elements.

    Layout: channels on sublanes, batch-major flattened spatial (Bt*H*W) on lanes.
    """
    HW = H * W
    L = Bt * HW

    def kernel(x_ref, c_ref, code_ref, mask_ref, w1t_ref, b1t_ref,
               w2t_ref, b2t_ref, out_ref, jacp_ref):
        # concat(input, input_cond) along channels, batch along lanes — VMEM only.
        xc = jnp.concatenate(
            [jnp.concatenate([x_ref[t], c_ref[t]], axis=0) for t in range(Bt)],
            axis=1)                                              # (C_in, Bt*HW)

        # ---- im2col (transposed): (9*C_in, Bt*HW) via XLU rolls ----
        # Validity masks are PRECOMPUTED in the wrapper (batch-invariant) and
        # applied with a single elementwise multiply; they also cancel the
        # roll wrap-around across image/batch boundaries.
        pieces = []
        for dy in range(3):
            for dx in range(3):
                sy, sx = dy - 1, dx - 1
                if sy == 0 and sx == 0:
                    pieces.append(xc)
                else:
                    shift = (-(sy * W + sx)) % L
                    pieces.append(pltpu.roll(xc, shift=shift, axis=1))
        patches = jnp.concatenate(pieces, axis=0)                # (9*C_in, L)
        patches = patches * mask_ref[...]                        # hoisted mask

        # ---- 3x3 conv (SAME) as ONE MXU matmul + bias + ReLU ----
        h = jnp.dot(w1t_ref[...], patches.astype(mxu_dtype),
                    preferred_element_type=jnp.float32)          # (C_hid, L)
        h = jnp.maximum(h + b1t_ref[...].astype(jnp.float32), 0.0)

        # ---- 1x1 conv: single merged matmul producing loc||scale (2C, L) ----
        cond = jnp.dot(w2t_ref[...], h.astype(mxu_dtype),
                       preferred_element_type=jnp.float32)
        cond = cond + b2t_ref[...].astype(jnp.float32)           # (2C, L)
        loc = cond[:C, :]                                        # (C, L)
        s = jax.nn.sigmoid(cond[C:, :]) * 2.0 - 1.0              # (C, L)

        # ---- affine coupling, lane-dense (C, Bt*HW) ----
        code = jnp.concatenate([code_ref[t] for t in range(Bt)], axis=1)
        if forward_dir:
            if not last_layer:
                code = code * jnp.exp(s)
            out = code + loc
        else:
            out = code - loc
            if not last_layer:
                out = out * jnp.exp(-s)     # mul by exp(-s): EUP + vmul, no divide

        for t in range(Bt):                 # lane-dense (HW = 256) stores
            out_ref[t] = out[:, t * HW:(t + 1) * HW]

        # Per-lane jacobian partials only (no cross-lane reduce, no masked
        # 1-lane store); final reduction + sign happen in the wrapper.
        jacp_ref[0] = jnp.sum(s, axis=0, keepdims=True)          # (1, L)

    return kernel


def cond_anf_forward(input_nchw, cond_nchw, code_nchw, params, *,
                     rev=False, transpose=False, last_layer=False,
                     mxu_dtype=jnp.float32):
    """Mirrors CondAugmentedNormalizedFlow.forward (use_affine=True)."""
    if code_nchw is None:
        # distribution='gaussian' -> init_code = randn_like(loc); loc has the
        # same shape as the input here.  Fixed JAX key stands in for torch RNG.
        code_nchw = jax.random.normal(jax.random.PRNGKey(123),
                                      input_nchw.shape, jnp.float32)
    if transpose:
        input_nchw, code_nchw = code_nchw, input_nchw

    B, C, H, W = input_nchw.shape
    HW = H * W

    # Batch-packing factor: fill the 8 f32 sublanes when C < 8.
    Bt = min(B, max(1, 8 // C))
    while B % Bt != 0:
        Bt -= 1
    nblk = B // Bt
    L = Bt * HW

    # Flattened NCHW (channels on sublanes, spatial on lanes) — reshape only,
    # no transposes, no concat/pad in HBM.
    x = input_nchw.reshape(B, C, HW).astype(jnp.float32)
    c = cond_nchw.reshape(B, C, HW).astype(jnp.float32)
    code = code_nchw.reshape(B, C, HW).astype(jnp.float32)

    w1, b1, w2, b2 = params                      # HWIO / (1,Ch) / (Ch,2C) / (1,2C)
    C_in, C_hid = w1.shape[2], w1.shape[3]

    # One-time tiny weight re-layouts for the channels-on-sublane orientation.
    # Loc/scale 1x1 weights kept MERGED: rows 0:C -> loc, rows C:2C -> scale.
    w1t = jnp.asarray(w1, jnp.float32).reshape(9 * C_in, C_hid).T.astype(mxu_dtype)
    b1t = jnp.asarray(b1, jnp.float32).reshape(C_hid, 1)
    w2t = jnp.asarray(w2, jnp.float32).T.astype(mxu_dtype)       # (2C, C_hid)
    b2t = jnp.asarray(b2, jnp.float32).reshape(2 * C, 1)

    # Hoisted im2col validity mask: batch-invariant, computed ONCE on host,
    # passed with a constant index_map so it stays VMEM-resident.
    pix = np.arange(HW)
    row_i, col_i = pix // W, pix % W
    taps = []
    for dy in range(3):
        for dx in range(3):
            sy, sx = dy - 1, dx - 1
            valid = ((row_i + sy >= 0) & (row_i + sy < H) &
                     (col_i + sx >= 0) & (col_i + sx < W))
            taps.append(np.tile(valid.astype(np.float32), Bt))
    mask_full = jnp.asarray(np.repeat(np.stack(taps), C_in, axis=0))  # (9*C_in, L)

    forward_dir = (not rev) ^ transpose
    jac_sign = -1.0 if (rev ^ transpose) else 1.0
    kernel = _make_kernel(H, W, C, C_in, C_hid, Bt, forward_dir, last_layer,
                          mxu_dtype)

    code_out, jacp = pl.pallas_call(
        kernel,
        out_shape=(jax.ShapeDtypeStruct((B, C, HW), jnp.float32),
                   jax.ShapeDtypeStruct((nblk, 1, L), jnp.float32)),
        grid_spec=pltpu.PrefetchScalarGridSpec(
            num_scalar_prefetch=0,
            grid=(nblk,),
            in_specs=[
                pl.BlockSpec((Bt, C, HW), lambda b: (b, 0, 0)),      # x
                pl.BlockSpec((Bt, C, HW), lambda b: (b, 0, 0)),      # cond
                pl.BlockSpec((Bt, C, HW), lambda b: (b, 0, 0)),      # code
                pl.BlockSpec((9 * C_in, L), lambda b: (0, 0)),       # im2col mask
                pl.BlockSpec((C_hid, 9 * C_in), lambda b: (0, 0)),   # w1t
                pl.BlockSpec((C_hid, 1), lambda b: (0, 0)),          # b1t
                pl.BlockSpec((2 * C, C_hid), lambda b: (0, 0)),      # w2t (merged)
                pl.BlockSpec((2 * C, 1), lambda b: (0, 0)),          # b2t (merged)
            ],
            out_specs=(
                pl.BlockSpec((Bt, C, HW), lambda b: (b, 0, 0)),      # code out
                pl.BlockSpec((1, 1, L), lambda b: (b, 0, 0)),        # jac partials
            ),
        ),
        compiler_params=pltpu.CompilerParams(
            dimension_semantics=("parallel",)),   # batch blocks shard across TCs
    )(x, c, code, mask_full, w1t, b1t, w2t, b2t)

    # Finish the jacobian reduction outside the kernel (deferred reduction).
    jac = jac_sign * jnp.sum(jacp.reshape(B, HW), axis=-1)
    code_out_nchw = code_out.reshape(B, C, H, W)  # reshape only, no transpose

    if transpose:
        input_nchw, code_out_nchw = code_out_nchw, input_nchw
    return input_nchw, code_out_nchw, jac


def _ref_forward(input_nchw, cond_nchw, code_nchw, params, *,
                 rev=False, transpose=False, last_layer=False):
    """Pure-JAX reference with identical semantics (exact f32 matmuls)."""
    w1, b1, w2, b2 = params
    if transpose:
        input_nchw, code_nchw = code_nchw, input_nchw
    x = jnp.transpose(input_nchw, (0, 2, 3, 1))
    c = jnp.transpose(cond_nchw, (0, 2, 3, 1))
    code = jnp.transpose(code_nchw, (0, 2, 3, 1))
    C = x.shape[-1]

    xc = jnp.concatenate([x, c], axis=-1)
    h = lax.conv_general_dilated(xc, w1, (1, 1), 'SAME',
                                 dimension_numbers=('NHWC', 'HWIO', 'NHWC'),
                                 precision=lax.Precision.HIGHEST)
    h = jnp.maximum(h + b1[0], 0.0)
    cond = jnp.einsum('bhwi,io->bhwo', h, w2,
                      precision=lax.Precision.HIGHEST) + b2[0]
    loc, scale = cond[..., :C], cond[..., C:]
    s = jax.nn.sigmoid(scale) * 2.0 - 1.0

    if (not rev) ^ transpose:
        if not last_layer:
            code = code * jnp.exp(s)
        out = code + loc
    else:
        out = code - loc
        if not last_layer:
            out = out / jnp.exp(s)

    jac = jnp.sum(s, axis=(1, 2, 3))
    if rev ^ transpose:
        jac = -jac

    out_nchw = jnp.transpose(out, (0, 3, 1, 2))
    if transpose:
        input_nchw, out_nchw = out_nchw, input_nchw
    return input_nchw, out_nchw, jac


if __name__ == "__main__":
    B, C, H, W = 2, 4, 16, 16
    C_hid = 32
    key = jax.random.PRNGKey(0)
    k = jax.random.split(key, 7)

    x = jax.random.normal(k[0], (B, C, H, W), jnp.float32)      # NCHW like PyTorch
    input_cond = jax.random.normal(k[1], (B, C, H, W), jnp.float32)
    code = jax.random.normal(k[2], (B, C, H, W), jnp.float32)   # gaussian init_code

    # Deterministic synthetic net_forward parameters (HWIO / (in,out) layouts).
    w1 = 0.1 * jax.random.normal(k[3], (3, 3, 2 * C, C_hid), jnp.float32)
    b1 = 0.1 * jax.random.normal(k[4], (1, C_hid), jnp.float32)
    w2 = 0.1 * jax.random.normal(k[5], (C_hid, 2 * C), jnp.float32)
    b2 = 0.1 * jax.random.normal(k[6], (1, 2 * C), jnp.float32)
    params = (w1, b1, w2, b2)

    # ---- forward direction ----
    x_out, code_out, jac = cond_anf_forward(x, input_cond, code, params,
                                            rev=False, transpose=False,
                                            last_layer=False)
    jax.block_until_ready((x_out, code_out, jac))
    x_ref, code_ref, jac_ref = _ref_forward(x, input_cond, code, params,
                                            rev=False, transpose=False,
                                            last_layer=False)
    np.testing.assert_allclose(np.asarray(x_out), np.asarray(x_ref),
                               rtol=1e-6, atol=1e-6)
    np.testing.assert_allclose(np.asarray(code_out), np.asarray(code_ref),
                               rtol=2e-3, atol=2e-3)
    np.testing.assert_allclose(np.asarray(jac), np.asarray(jac_ref),
                               rtol=2e-3, atol=2e-2)

    # ---- reverse direction (exercises the exp(-s) branch) ----
    x_out_r, code_out_r, jac_r = cond_anf_forward(x, input_cond, code, params,
                                                  rev=True, transpose=False,
                                                  last_layer=False)
    jax.block_until_ready((x_out_r, code_out_r, jac_r))
    x_ref_r, code_ref_r, jac_ref_r = _ref_forward(x, input_cond, code, params,
                                                  rev=True, transpose=False,
                                                  last_layer=False)
    np.testing.assert_allclose(np.asarray(code_out_r), np.asarray(code_ref_r),
                               rtol=2e-3, atol=2e-3)
    np.testing.assert_allclose(np.asarray(jac_r), np.asarray(jac_ref_r),
                               rtol=2e-3, atol=2e-2)

    print("KERNEL_OK")
</pallas_src>

<mosaic_0001>
module attributes {stable_mosaic.version = 11 : i64} {
  func.func @kernel(%arg0: i32, %arg1: memref<2x4x256xf32, #tpu.memory_space<vmem>>, %arg2: memref<2x4x256xf32, #tpu.memory_space<vmem>>, %arg3: memref<2x4x256xf32, #tpu.memory_space<vmem>>, %arg4: memref<72x512xf32, #tpu.memory_space<vmem>>, %arg5: memref<32x72xf32, #tpu.memory_space<vmem>>, %arg6: memref<32x1xf32, #tpu.memory_space<vmem>>, %arg7: memref<8x32xf32, #tpu.memory_space<vmem>>, %arg8: memref<8x1xf32, #tpu.memory_space<vmem>>, %arg9: memref<2x4x256xf32, #tpu.memory_space<vmem>>, %arg10: memref<1x1x512xf32, #tpu.memory_space<vmem>>) attributes {dimension_semantics = [#tpu.dimension_semantics<parallel>], iteration_bounds = array<i64: 1>, scalar_prefetch = 0 : i64, scratch_operands = 0 : i64, tpu.core_type = #tpu.core_type<tc>, window_params = [{transform_indices = @transform_0, window_bounds = array<i64: 2, 4, 256>}, {transform_indices = @transform_1, window_bounds = array<i64: 2, 4, 256>}, {transform_indices = @transform_2, window_bounds = array<i64: 2, 4, 256>}, {pipeline_mode = #tpu.pipeline_mode<synchronous>, transform_indices = @transform_3, window_bounds = array<i64: 72, 512>}, {pipeline_mode = #tpu.pipeline_mode<synchronous>, transform_indices = @transform_4, window_bounds = array<i64: 32, 72>}, {pipeline_mode = #tpu.pipeline_mode<synchronous>, transform_indices = @transform_5, window_bounds = array<i64: 32, 1>}, {pipeline_mode = #tpu.pipeline_mode<synchronous>, transform_indices = @transform_6, window_bounds = array<i64: 8, 32>}, {pipeline_mode = #tpu.pipeline_mode<synchronous>, transform_indices = @transform_7, window_bounds = array<i64: 8, 1>}, {transform_indices = @transform_8, window_bounds = array<i64: 2, 4, 256>}, {transform_indices = @transform_9, window_bounds = array<i64: 1, 1, 512>}]} {
    %c0 = arith.constant 0 : index
    %c0_0 = arith.constant 0 : index
    %c0_1 = arith.constant 0 : index
    %0 = vector.load %arg1[%c0, %c0_0, %c0_1] : memref<2x4x256xf32, #tpu.memory_space<vmem>>, vector<1x4x256xf32>
    %1 = vector.shape_cast %0 : vector<1x4x256xf32> to vector<4x256xf32>
    %c0_2 = arith.constant 0 : index
    %c0_3 = arith.constant 0 : index
    %c0_4 = arith.constant 0 : index
    %2 = vector.load %arg2[%c0_2, %c0_3, %c0_4] : memref<2x4x256xf32, #tpu.memory_space<vmem>>, vector<1x4x256xf32>
    %3 = vector.shape_cast %2 : vector<1x4x256xf32> to vector<4x256xf32>
    %4 = tpu.concatenate %1, %3 in 0 : vector<4x256xf32>, vector<4x256xf32> -> vector<8x256xf32>
    %c1 = arith.constant 1 : index
    %c0_5 = arith.constant 0 : index
    %c0_6 = arith.constant 0 : index
    %5 = vector.load %arg1[%c1, %c0_5, %c0_6] : memref<2x4x256xf32, #tpu.memory_space<vmem>>, vector<1x4x256xf32>
    %6 = vector.shape_cast %5 : vector<1x4x256xf32> to vector<4x256xf32>
    %c1_7 = arith.constant 1 : index
    %c0_8 = arith.constant 0 : index
    %c0_9 = arith.constant 0 : index
    %7 = vector.load %arg2[%c1_7, %c0_8, %c0_9] : memref<2x4x256xf32, #tpu.memory_space<vmem>>, vector<1x4x256xf32>
    %8 = vector.shape_cast %7 : vector<1x4x256xf32> to vector<4x256xf32>
    %9 = tpu.concatenate %6, %8 in 0 : vector<4x256xf32>, vector<4x256xf32> -> vector<8x256xf32>
    %10 = tpu.concatenate %4, %9 in 1 : vector<8x256xf32>, vector<8x256xf32> -> vector<8x512xf32>
    %c17_i32 = arith.constant 17 : i32
    %11 = tpu.dynamic_rotate %10 by %c17_i32 dim 1 : vector<8x512xf32>, i32 -> vector<8x512xf32>
    %c16_i32 = arith.constant 16 : i32
    %12 = tpu.dynamic_rotate %10 by %c16_i32 dim 1 : vector<8x512xf32>, i32 -> vector<8x512xf32>
    %c15_i32 = arith.constant 15 : i32
    %13 = tpu.dynamic_rotate %10 by %c15_i32 dim 1 : vector<8x512xf32>, i32 -> vector<8x512xf32>
    %c1_i32 = arith.constant 1 : i32
    %14 = tpu.dynamic_rotate %10 by %c1_i32 dim 1 : vector<8x512xf32>, i32 -> vector<8x512xf32>
    %c511_i32 = arith.constant 511 : i32
    %15 = tpu.dynamic_rotate %10 by %c511_i32 dim 1 : vector<8x512xf32>, i32 -> vector<8x512xf32>
    %c497_i32 = arith.constant 497 : i32
    %16 = tpu.dynamic_rotate %10 by %c497_i32 dim 1 : vector<8x512xf32>, i32 -> vector<8x512xf32>
    %c496_i32 = arith.constant 496 : i32
    %17 = tpu.dynamic_rotate %10 by %c496_i32 dim 1 : vector<8x512xf32>, i32 -> vector<8x512xf32>
    %c495_i32 = arith.constant 495 : i32
    %18 = tpu.dynamic_rotate %10 by %c495_i32 dim 1 : vector<8x512xf32>, i32 -> vector<8x512xf32>
    %19 = tpu.concatenate %11, %12, %13, %14, %10, %15, %16, %17, %18 in 0 : vector<8x512xf32>, vector<8x512xf32>, vector<8x512xf32>, vector<8x512xf32>, vector<8x512xf32>, vector<8x512xf32>, vector<8x512xf32>, vector<8x512xf32>, vector<8x512xf32> -> vector<72x512xf32>
    %c0_10 = arith.constant 0 : index
    %c0_11 = arith.constant 0 : index
    %20 = vector.load %arg4[%c0_10, %c0_11] : memref<72x512xf32, #tpu.memory_space<vmem>>, vector<72x512xf32>
    %21 = arith.mulf %19, %20 : vector<72x512xf32>
    %c0_12 = arith.constant 0 : index
    %c0_13 = arith.constant 0 : index
    %22 = vector.load %arg5[%c0_12, %c0_13] : memref<32x72xf32, #tpu.memory_space<vmem>>, vector<32x72xf32>
    %cst = arith.constant dense<0.000000e+00> : vector<32x512xf32>
    %23 = tpu.matmul %22, %21, %cst {dimension_numbers = #tpu.dot_dimension_numbers<[1], [0], [0], [1], [0, 0, 1, 1], [], []>} : vector<32x72xf32>, vector<72x512xf32>, vector<32x512xf32> -> vector<32x512xf32>
    %c0_14 = arith.constant 0 : index
    %c0_15 = arith.constant 0 : index
    %24 = vector.load %arg6[%c0_14, %c0_15] : memref<32x1xf32, #tpu.memory_space<vmem>>, vector<32x1xf32>
    %25 = vector.broadcast %24 : vector<32x1xf32> to vector<32x512xf32>
    %26 = arith.addf %23, %25 : vector<32x512xf32>
    %cst_16 = arith.constant 0.000000e+00 : f32
    %27 = vector.broadcast %cst_16 : f32 to vector<32x512xf32>
    %28 = arith.maximumf %26, %27 : vector<32x512xf32>
    %c0_17 = arith.constant 0 : index
    %c0_18 = arith.constant 0 : index
    %29 = vector.load %arg7[%c0_17, %c0_18] : memref<8x32xf32, #tpu.memory_space<vmem>>, vector<8x32xf32>
    %cst_19 = arith.constant dense<0.000000e+00> : vector<8x512xf32>
    %30 = tpu.matmul %29, %28, %cst_19 {dimension_numbers = #tpu.dot_dimension_numbers<[1], [0], [0], [1], [0, 0, 1, 1], [], []>} : vector<8x32xf32>, vector<32x512xf32>, vector<8x512xf32> -> vector<8x512xf32>
    %c0_20 = arith.constant 0 : index
    %c0_21 = arith.constant 0 : index
    %31 = vector.load %arg8[%c0_20, %c0_21] : memref<8x1xf32, #tpu.memory_space<vmem>>, vector<8x1xf32>
    %32 = vector.broadcast %31 : vector<8x1xf32> to vector<8x512xf32>
    %33 = arith.addf %30, %32 : vector<8x512xf32>
    %34 = vector.extract_strided_slice %33 {offsets = [0, 0], sizes = [4, 512], strides = [1, 1]} : vector<8x512xf32> to vector<4x512xf32>
    %35 = vector.extract_strided_slice %33 {offsets = [4, 0], sizes = [4, 512], strides = [1, 1]} : vector<8x512xf32> to vector<4x512xf32>
    %36 = arith.negf %35 : vector<4x512xf32>
    %37 = math.exp %36 : vector<4x512xf32>
    %cst_22 = arith.constant 1.000000e+00 : f32
    %38 = vector.broadcast %cst_22 : f32 to vector<4x512xf32>
    %39 = arith.addf %38, %37 : vector<4x512xf32>
    %40 = arith.divf %38, %39 : vector<4x512xf32>
    %cst_23 = arith.constant 2.000000e+00 : f32
    %41 = vector.broadcast %cst_23 : f32 to vector<4x512xf32>
    %42 = arith.mulf %40, %41 : vector<4x512xf32>
    %cst_24 = arith.constant 1.000000e+00 : f32
    %43 = vector.broadcast %cst_24 : f32 to vector<4x512xf32>
    %44 = arith.subf %42, %43 : vector<4x512xf32>
    %c0_25 = arith.constant 0 : index
    %c0_26 = arith.constant 0 : index
    %c0_27 = arith.constant 0 : index
    %45 = vector.load %arg3[%c0_25, %c0_26, %c0_27] : memref<2x4x256xf32, #tpu.memory_space<vmem>>, vector<1x4x256xf32>
    %46 = vector.shape_cast %45 : vector<1x4x256xf32> to vector<4x256xf32>
    %c1_28 = arith.constant 1 : index
    %c0_29 = arith.constant 0 : index
    %c0_30 = arith.constant 0 : index
    %47 = vector.load %arg3[%c1_28, %c0_29, %c0_30] : memref<2x4x256xf32, #tpu.memory_space<vmem>>, vector<1x4x256xf32>
    %48 = vector.shape_cast %47 : vector<1x4x256xf32> to vector<4x256xf32>
    %49 = tpu.concatenate %46, %48 in 1 : vector<4x256xf32>, vector<4x256xf32> -> vector<4x512xf32>
    %50 = math.exp %44 : vector<4x512xf32>
    %51 = arith.mulf %49, %50 : vector<4x512xf32>
    %52 = arith.addf %51, %34 : vector<4x512xf32>
    %53 = vector.extract_strided_slice %52 {offsets = [0, 0], sizes = [4, 256], strides = [1, 1]} : vector<4x512xf32> to vector<4x256xf32>
    %c0_31 = arith.constant 0 : index
    %c0_32 = arith.constant 0 : index
    %c0_33 = arith.constant 0 : index
    %54 = vector.load %arg9[%c0_31, %c0_32, %c0_33] : memref<2x4x256xf32, #tpu.memory_space<vmem>>, vector<1x4x256xf32>
    %55 = vector.shape_cast %54 : vector<1x4x256xf32> to vector<4x256xf32>
    %56 = vector.shape_cast %53 : vector<4x256xf32> to vector<1x4x256xf32>
    tpu.vector_store %arg9[%c0_31, %c0_32, %c0_33], %56 {strides = array<i32>} : memref<2x4x256xf32, #tpu.memory_space<vmem>>, vector<1x4x256xf32>,
    %57 = vector.extract_strided_slice %52 {offsets = [0, 256], sizes = [4, 256], strides = [1, 1]} : vector<4x512xf32> to vector<4x256xf32>
    %c1_34 = arith.constant 1 : index
    %c0_35 = arith.constant 0 : index
    %c0_36 = arith.constant 0 : index
    %58 = vector.load %arg9[%c1_34, %c0_35, %c0_36] : memref<2x4x256xf32, #tpu.memory_space<vmem>>, vector<1x4x256xf32>
    %59 = vector.shape_cast %58 : vector<1x4x256xf32> to vector<4x256xf32>
    %60 = vector.shape_cast %57 : vector<4x256xf32> to vector<1x4x256xf32>
    tpu.vector_store %arg9[%c1_34, %c0_35, %c0_36], %60 {strides = array<i32>} : memref<2x4x256xf32, #tpu.memory_space<vmem>>, vector<1x4x256xf32>,
    %cst_37 = arith.constant dense<0.000000e+00> : vector<512xf32>
    %61 = vector.multi_reduction <add>, %44, %cst_37 [0] : vector<4x512xf32> to vector<512xf32>
    %62 = vector.shape_cast %61 : vector<512xf32> to vector<1x512xf32>
    %c0_38 = arith.constant 0 : index
    %c0_39 = arith.constant 0 : index
    %c0_40 = arith.constant 0 : index
    %63 = vector.load %arg10[%c0_38, %c0_39, %c0_40] : memref<1x1x512xf32, #tpu.memory_space<vmem>>, vector<1x1x512xf32>
    %64 = vector.shape_cast %63 : vector<1x1x512xf32> to vector<1x512xf32>
    %65 = vector.shape_cast %62 : vector<1x512xf32> to vector<1x1x512xf32>
    tpu.vector_store %arg10[%c0_38, %c0_39, %c0_40], %65 {strides = array<i32>} : memref<1x1x512xf32, #tpu.memory_space<vmem>>, vector<1x1x512xf32>,
    return
  }
  func.func @transform_0(%arg0: i32) -> (i32, i32, i32) {
    %c0_i32 = arith.constant 0 : i32
    %c0_i32_0 = arith.constant 0 : i32
    %c0_i32_1 = arith.constant 0 : i32
    return %arg0, %c0_i32, %c0_i32_0 : i32, i32, i32
  }
  func.func @transform_1(%arg0: i32) -> (i32, i32, i32) {
    %c0_i32 = arith.constant 0 : i32
    %c0_i32_0 = arith.constant 0 : i32
    %c0_i32_1 = arith.constant 0 : i32
    return %arg0, %c0_i32, %c0_i32_0 : i32, i32, i32
  }
  func.func @transform_2(%arg0: i32) -> (i32, i32, i32) {
    %c0_i32 = arith.constant 0 : i32
    %c0_i32_0 = arith.constant 0 : i32
    %c0_i32_1 = arith.constant 0 : i32
    return %arg0, %c0_i32, %c0_i32_0 : i32, i32, i32
  }
  func.func @transform_3(%arg0: i32) -> (i32, i32) {
    %c0_i32 = arith.constant 0 : i32
    %c0_i32_0 = arith.constant 0 : i32
    %c0_i32_1 = arith.constant 0 : i32
    return %c0_i32, %c0_i32_0 : i32, i32
  }
  func.func @transform_4(%arg0: i32) -> (i32, i32) {
    %c0_i32 = arith.constant 0 : i32
    %c0_i32_0 = arith.constant 0 : i32
    %c0_i32_1 = arith.constant 0 : i32
    return %c0_i32, %c0_i32_0 : i32, i32
  }
  func.func @transform_5(%arg0: i32) -> (i32, i32) {
    %c0_i32 = arith.constant 0 : i32
    %c0_i32_0 = arith.constant 0 : i32
    %c0_i32_1 = arith.constant 0 : i32
    return %c0_i32, %c0_i32_0 : i32, i32
  }
  func.func @transform_6(%arg0: i32) -> (i32, i32) {
    %c0_i32 = arith.constant 0 : i32
    %c0_i32_0 = arith.constant 0 : i32
    %c0_i32_1 = arith.constant 0 : i32
    return %c0_i32, %c0_i32_0 : i32, i32
  }
  func.func @transform_7(%arg0: i32) -> (i32, i32) {
    %c0_i32 = arith.constant 0 : i32
    %c0_i32_0 = arith.constant 0 : i32
    %c0_i32_1 = arith.constant 0 : i32
    return %c0_i32, %c0_i32_0 : i32, i32
  }
  func.func @transform_8(%arg0: i32) -> (i32, i32, i32) {
    %c0_i32 = arith.constant 0 : i32
    %c0_i32_0 = arith.constant 0 : i32
    %c0_i32_1 = arith.constant 0 : i32
    return %arg0, %c0_i32, %c0_i32_0 : i32, i32, i32
  }
  func.func @transform_9(%arg0: i32) -> (i32, i32, i32) {
    %c0_i32 = arith.constant 0 : i32
    %c0_i32_0 = arith.constant 0 : i32
    %c0_i32_1 = arith.constant 0 : i32
    return %arg0, %c0_i32, %c0_i32_0 : i32, i32, i32
  }
}

</mosaic_0001>

<llo_original>
// kernel: tpu_custom_call.1
$region0: #{tpu_custom_call.1}
  #allocation0 [shape = 'u32[]', space=smem, size = 0x4, offset = 0x4, fixed_abs, tag = 'smem constant byte address 0x4 - core index']
  #allocation1 [shape = 'u32[72,128]{1,0:T(1,128)}', space=vmem, size = 0x9000, scoped, tag = 'internal scratch']
  %s0 = inlined_call_operand.hbm [shape: f32[2,4,256], index: 0, kind: input, shape index: {}]
  %s1 = inlined_call_operand.hbm [shape: f32[2,4,256], index: 1, kind: input, shape index: {}]
  %s2 = inlined_call_operand.hbm [shape: f32[2,4,256], index: 2, kind: input, shape index: {}]
  %s3 = inlined_call_operand.hbm [shape: f32[72,512], index: 3, kind: input, shape index: {}]
  %s4 = inlined_call_operand.vmem [shape: f32[32,72], index: 4, kind: input, shape index: {}]
  %s5 = inlined_call_operand.vmem [shape: f32[32,1], index: 5, kind: input, shape index: {}]
  %s6 = inlined_call_operand.vmem [shape: f32[8,32], index: 6, kind: input, shape index: {}]
  %s7 = inlined_call_operand.vmem [shape: f32[8,1], index: 7, kind: input, shape index: {}]
  %s8 = inlined_call_operand.hbm [shape: f32[2,4,256], index: 8, kind: output, shape index: {0}]
  %s9 = inlined_call_operand.hbm [shape: f32[1,1,512], index: 9, kind: output, shape index: {1}]
  %10 = xla_tuple %s8, %s9
  %s11 = sld [smem:[#allocation0]]
  $region66: #{tpu_custom_call.1} parent=0
    _
  %s13 = ssub.s32 1, %s11
  %s14 = scalar_select 0, %s13, %s11
  $region1: #{tpu_custom_call.1} parent=0
    #allocation2 [shape = 'u8[8192]{0}', space=vmem, size = 0x2000, scoped, tag = 'input window, operand 0, single buffered']
    #allocation3 [shape = 's32[1]{0}', space=sflag, size = 0x4, scoped, tag = 'scoped memory for tpu_custom_call.1']
    #allocation4 [shape = 's32[1]{0}', space=sflag, size = 0x4, scoped, tag = 'scoped memory for tpu_custom_call.1']
    #allocation5 [shape = 'u8[8192]{0}', space=vmem, size = 0x2000, scoped, tag = 'input window, operand 1, single buffered']
    #allocation6 [shape = 's32[1]{0}', space=sflag, size = 0x4, scoped, tag = 'scoped memory for tpu_custom_call.1']
    #allocation7 [shape = 'u8[8192]{0}', space=vmem, size = 0x2000, scoped, tag = 'input window, operand 2, single buffered']
    #allocation8 [shape = 'u8[147456]{0}', space=vmem, size = 0x24000, scoped, tag = 'input window, operand 3, single buffered']
    #allocation9 [shape = 's32[1]{0}', space=sflag, size = 0x4, scoped, tag = 'scoped memory for tpu_custom_call.1']
    #allocation10 [shape = 'u8[8192]{0}', space=vmem, size = 0x2000, scoped, tag = 'output window, operand 0, single buffered']
    #allocation11 [shape = 'u8[2048]{0}', space=vmem, size = 0x800, scoped, tag = 'output window, operand 1, single buffered']
    #allocation12 [shape = 's32[1]{0}', space=sflag, size = 0x4, scoped, tag = 'scoped memory for tpu_custom_call.1']
    %15 = vsyncpa [#allocation3], 0
    %16 = vsyncpa [#allocation6], 0
    %17 = vsyncpa [#allocation9], 0
    %18 = vsyncpa [#allocation4], 0
    %19 = vsyncpa [#allocation12], 0
    // Predicated region
    $region2: #{tpu_custom_call.1} parent=1 // pred_check
      _
    $region3: #{tpu_custom_call.1} parent=1 // pred_check_branch
      %21 = sbr.rel (0) target = $region5
    $region4: #{tpu_custom_call.1} parent=1 // pred_region
      %23 = vsyncadd [#allocation3], 0
      %s24 = sshll.u32 %s0, 4
      %s25 = int_to_ptr.hbm [resolvable:$true] %s24
      %s26 = sshll.u32 [#allocation2], 4
      %s27 = int_to_ptr.vmem [resolvable:$true] %s26
      %32 = dma.hbm_to_vmem [thread:$0]  %s25, 256, %s27, [#allocation3], 128, 128, 8
    $region5: #{tpu_custom_call.1} parent=1 // pred_fallthru
      _
    // Predicated region
    $region6: #{tpu_custom_call.1} parent=1 // pred_check
      _
    $region7: #{tpu_custom_call.1} parent=1 // pred_check_branch
      %34 = sbr.rel (0) target = $region9
    $region8: #{tpu_custom_call.1} parent=1 // pred_region
      %36 = vsyncadd [#allocation6], 0
      %s37 = sshll.u32 %s1, 4
      %s38 = int_to_ptr.hbm [resolvable:$true] %s37
      %s39 = sshll.u32 [#allocation5], 4
      %s40 = int_to_ptr.vmem [resolvable:$true] %s39
      %45 = dma.hbm_to_vmem [thread:$0]  %s38, 256, %s40, [#allocation6], 128, 128, 8
    $region9: #{tpu_custom_call.1} parent=1 // pred_fallthru
      _
    // Predicated region
    $region10: #{tpu_custom_call.1} parent=1 // pred_check
      _
    $region11: #{tpu_custom_call.1} parent=1 // pred_check_branch
      %47 = sbr.rel (0) target = $region13
    $region12: #{tpu_custom_call.1} parent=1 // pred_region
      %49 = vsyncadd [#allocation6], 0
      %s50 = sshll.u32 %s2, 4
      %s51 = int_to_ptr.hbm [resolvable:$true] %s50
      %s52 = sshll.u32 [#allocation7], 4
      %s53 = int_to_ptr.vmem [resolvable:$true] %s52
      %58 = dma.hbm_to_vmem [thread:$0]  %s51, 256, %s53, [#allocation6], 128, 128, 8
    $region13: #{tpu_custom_call.1} parent=1 // pred_fallthru
      _
    // Predicated region
    $region14: #{tpu_custom_call.1} parent=1 // pred_check
      _
    $region15: #{tpu_custom_call.1} parent=1 // pred_check_branch
      %60 = sbr.rel (0) target = $region17
    $region16: #{tpu_custom_call.1} parent=1 // pred_region
      %62 = vsyncadd [#allocation9], 0
      %s63 = sshll.u32 %s3, 4
      %s64 = int_to_ptr.hbm [resolvable:$true] %s63
      %s65 = sshll.u32 [#allocation8], 4
      %s66 = int_to_ptr.vmem [resolvable:$true] %s65
      %71 = dma.hbm_to_vmem [thread:$0]  %s64, 4608, %s66, [#allocation9], 512, 512, 32
    $region17: #{tpu_custom_call.1} parent=1 // pred_fallthru
      _
    // Predicated region
    $region18: #{tpu_custom_call.1} parent=1 // pred_check
      _
    $region19: #{tpu_custom_call.1} parent=1 // pred_check_branch
      %73 = sbr.rel (0) target = $region21
    $region20: #{tpu_custom_call.1} parent=1 // pred_region
      _
    $region21: #{tpu_custom_call.1} parent=1 // pred_fallthru
      _
    // Predicated region
    $region22: #{tpu_custom_call.1} parent=1 // pred_check
      _
    $region23: #{tpu_custom_call.1} parent=1 // pred_check_branch
      %75 = sbr.rel (0) target = $region25
    $region24: #{tpu_custom_call.1} parent=1 // pred_region
      _
    $region25: #{tpu_custom_call.1} parent=1 // pred_fallthru
      _
    // Predicated region
    $region26: #{tpu_custom_call.1} parent=1 // pred_check
      _
    $region27: #{tpu_custom_call.1} parent=1 // pred_check_branch
      %77 = sbr.rel (0) target = $region29
    $region28: #{tpu_custom_call.1} parent=1 // pred_region
      _
    $region29: #{tpu_custom_call.1} parent=1 // pred_fallthru
      _
    // Predicated region
    $region30: #{tpu_custom_call.1} parent=1 // pred_check
      _
    $region31: #{tpu_custom_call.1} parent=1 // pred_check_branch
      %79 = sbr.rel (0) target = $region33
    $region32: #{tpu_custom_call.1} parent=1 // pred_region
      _
    $region33: #{tpu_custom_call.1} parent=1 // pred_fallthru
      _
    // Predicated region
    $region34: #{tpu_custom_call.1} parent=1 // pred_check
      _
    $region35: #{tpu_custom_call.1} parent=1 // pred_check_branch
      %81 = sbr.rel (0) target = $region37
    $region36: #{tpu_custom_call.1} parent=1 // pred_region
      %83 = dma.done [#allocation3], 256
    $region37: #{tpu_custom_call.1} parent=1 // pred_fallthru
      _
    // Predicated region
    $region38: #{tpu_custom_call.1} parent=1 // pred_check
      _
    $region39: #{tpu_custom_call.1} parent=1 // pred_check_branch
      %85 = sbr.rel (0) target = $region41
    $region40: #{tpu_custom_call.1} parent=1 // pred_region
      %87 = dma.done [#allocation6], 256
    $region41: #{tpu_custom_call.1} parent=1 // pred_fallthru
      _
    // Predicated region
    $region42: #{tpu_custom_call.1} parent=1 // pred_check
      _
    $region43: #{tpu_custom_call.1} parent=1 // pred_check_branch
      %89 = sbr.rel (0) target = $region45
    $region44: #{tpu_custom_call.1} parent=1 // pred_region
      %91 = dma.done [#allocation6], 256
    $region45: #{tpu_custom_call.1} parent=1 // pred_fallthru
      _
    // Predicated region
    $region46: #{tpu_custom_call.1} parent=1 // pred_check
      _
    $region47: #{tpu_custom_call.1} parent=1 // pred_check_branch
      %93 = sbr.rel (0) target = $region49
    $region48: #{tpu_custom_call.1} parent=1 // pred_region
      %95 = dma.done [#allocation9], 4608
    $region49: #{tpu_custom_call.1} parent=1 // pred_fallthru
      _
    %v96 = vld [vmem:[#allocation2] sm:$0xff]
    %v97 = vld [vmem:[#allocation5] sm:$0xff]
    %99 = vst [vmem:[#allocation1] ss:$2 sm:$0xff] %v96
    %v100 = vld.sshfl [vmem:[#allocation1] sm:$0xff pattern:$0x75316420]
    %v101 = vld.sshfl [vmem:[#allocation1 + $0x8] sm:$0xff pattern:$0x75316420]
    %s105 = scalar_lea.vmem [#allocation1], 1
    %106 = vst [vmem:[%s105] ss:$2 sm:$0xff] %v97
    %v107 = vld.sshfl [vmem:[#allocation1] sm:$0xff pattern:$0x75316420]
    %v108 = vld.sshfl [vmem:[#allocation1 + $0x8] sm:$0xff pattern:$0x75316420]
    %vm111 = vcmask 1043456
    %v112 = vsel %vm111, %v100, %v107
    %v113 = vsel %vm111, %v101, %v108
    %s114 = scalar_lea.vmem [#allocation2], 8
    %v115 = vld [vmem:[%s114] sm:$0xff]
    %s116 = scalar_lea.vmem [#allocation5], 8
    %v117 = vld [vmem:[%s116] sm:$0xff]
    %119 = vst [vmem:[#allocation1] ss:$2 sm:$0xff] %v115
    %v120 = vld.sshfl [vmem:[#allocation1] sm:$0xff pattern:$0x75316420]
    %v121 = vld.sshfl [vmem:[#allocation1 + $0x8] sm:$0xff pattern:$0x75316420]
    %s125 = scalar_lea.vmem [#allocation1], 1
    %126 = vst [vmem:[%s125] ss:$2 sm:$0xff] %v117
    %v127 = vld.sshfl [vmem:[#allocation1] sm:$0xff pattern:$0x75316420]
    %v128 = vld.sshfl [vmem:[#allocation1 + $0x8] sm:$0xff pattern:$0x75316420]
    %v131 = vsel %vm111, %v120, %v127
    %v132 = vsel %vm111, %v121, %v128
    %133 = vrot.lane.b32.xlu0 %v112, 17
    %v134 = vpop.permute.xlu0 %133
    %135 = vrot.lane.b32.xlu0 %v113, 17
    %v136 = vpop.permute.xlu0 %135
    %137 = vrot.lane.b32.xlu0 %v131, 17
    %v138 = vpop.permute.xlu0 %137
    %139 = vrot.lane.b32.xlu0 %v132, 17
    %v140 = vpop.permute.xlu0 %139
    %v141 = vlaneseq
    %v142 = vand.u32 %v141, 127
    %vm143 = vcmp.lt.s32.totalorder %v142, 17
    %v144 = vsel %vm143, %v138, %v140
    %v145 = vsel %vm143, %v136, %v138
    %v146 = vsel %vm143, %v134, %v136
    %v147 = vsel %vm143, %v140, %v134
    %148 = vrot.lane.b32.xlu0 %v112, 16
    %v149 = vpop.permute.xlu0 %148
    %150 = vrot.lane.b32.xlu0 %v113, 16
    %v151 = vpop.permute.xlu0 %150
    %152 = vrot.lane.b32.xlu0 %v131, 16
    %v153 = vpop.permute.xlu0 %152
    %154 = vrot.lane.b32.xlu0 %v132, 16
    %v155 = vpop.permute.xlu0 %154
    %vm156 = vcmp.lt.s32.totalorder %v142, 16
    %v157 = vsel %vm156, %v153, %v155
    %v158 = vsel %vm156, %v151, %v153
    %v159 = vsel %vm156, %v149, %v151
    %v160 = vsel %vm156, %v155, %v149
    %161 = vrot.lane.b32.xlu0 %v112, 15
    %v162 = vpop.permute.xlu0 %161
    %163 = vrot.lane.b32.xlu0 %v113, 15
    %v164 = vpop.permute.xlu0 %163
    %165 = vrot.lane.b32.xlu0 %v131, 15
    %v166 = vpop.permute.xlu0 %165
    %167 = vrot.lane.b32.xlu0 %v132, 15
    %v168 = vpop.permute.xlu0 %167
    %vm169 = vcmp.lt.s32.totalorder %v142, 15
    %v170 = vsel %vm169, %v166, %v168
    %v171 = vsel %vm169, %v164, %v166
    %v172 = vsel %vm169, %v162, %v164
    %v173 = vsel %vm169, %v168, %v162
    %174 = vrot.lane.b32.xlu0 %v112, 1
    %v175 = vpop.permute.xlu0 %174
    %176 = vrot.lane.b32.xlu0 %v113, 1
    %v177 = vpop.permute.xlu0 %176
    %178 = vrot.lane.b32.xlu0 %v131, 1
    %v179 = vpop.permute.xlu0 %178
    %180 = vrot.lane.b32.xlu0 %v132, 1
    %v181 = vpop.permute.xlu0 %180
    %vm182 = vcmp.lt.s32.totalorder %v142, 1
    %v183 = vsel %vm182, %v179, %v181
    %v184 = vsel %vm182, %v177, %v179
    %v185 = vsel %vm182, %v175, %v177
    %v186 = vsel %vm182, %v181, %v175
    %187 = vrot.lane.b32.xlu0 %v112, 127
    %v188 = vpop.permute.xlu0 %187
    %189 = vrot.lane.b32.xlu0 %v113, 127
    %v190 = vpop.permute.xlu0 %189
    %191 = vrot.lane.b32.xlu0 %v131, 127
    %v192 = vpop.permute.xlu0 %191
    %193 = vrot.lane.b32.xlu0 %v132, 127
    %v194 = vpop.permute.xlu0 %193
    %vm195 = vcmp.lt.s32.totalorder %v142, 127
    %v196 = vsel %vm195, %v192, %v194
    %v197 = vsel %vm195, %v190, %v192
    %v198 = vsel %vm195, %v188, %v190
    %v199 = vsel %vm195, %v194, %v188
    %200 = vrot.lane.b32.xlu0 %v112, 113
    %v201 = vpop.permute.xlu0 %200
    %202 = vrot.lane.b32.xlu0 %v113, 113
    %v203 = vpop.permute.xlu0 %202
    %204 = vrot.lane.b32.xlu0 %v131, 113
    %v205 = vpop.permute.xlu0 %204
    %206 = vrot.lane.b32.xlu0 %v132, 113
    %v207 = vpop.permute.xlu0 %206
    %vm208 = vcmp.lt.s32.totalorder %v142, 113
    %v209 = vsel %vm208, %v205, %v207
    %v210 = vsel %vm208, %v203, %v205
    %v211 = vsel %vm208, %v201, %v203
    %v212 = vsel %vm208, %v207, %v201
    %213 = vrot.lane.b32.xlu0 %v112, 112
    %v214 = vpop.permute.xlu0 %213
    %215 = vrot.lane.b32.xlu0 %v113, 112
    %v216 = vpop.permute.xlu0 %215
    %217 = vrot.lane.b32.xlu0 %v131, 112
    %v218 = vpop.permute.xlu0 %217
    %219 = vrot.lane.b32.xlu0 %v132, 112
    %v220 = vpop.permute.xlu0 %219
    %vm221 = vcmp.lt.s32.totalorder %v142, 112
    %v222 = vsel %vm221, %v218, %v220
    %v223 = vsel %vm221, %v216, %v218
    %v224 = vsel %vm221, %v214, %v216
    %v225 = vsel %vm221, %v220, %v214
    %226 = vrot.lane.b32.xlu0 %v112, 111
    %v227 = vpop.permute.xlu0 %226
    %228 = vrot.lane.b32.xlu0 %v113, 111
    %v229 = vpop.permute.xlu0 %228
    %230 = vrot.lane.b32.xlu0 %v131, 111
    %v231 = vpop.permute.xlu0 %230
    %232 = vrot.lane.b32.xlu0 %v132, 111
    %v233 = vpop.permute.xlu0 %232
    %vm234 = vcmp.lt.s32.totalorder %v142, 111
    %v235 = vsel %vm234, %v231, %v233
    %v236 = vsel %vm234, %v229, %v231
    %v237 = vsel %vm234, %v227, %v229
    %v238 = vsel %vm234, %v233, %v227
    %v239 = vld [vmem:[#allocation8] sm:$0xff]
    %v240 = vld [vmem:[#allocation8 + $0x8] sm:$0xff]
    %v241 = vld [vmem:[#allocation8 + $0x10] sm:$0xff]
    %v242 = vld [vmem:[#allocation8 + $0x18] sm:$0xff]
    %v243 = vld [vmem:[#allocation8 + $0x20] sm:$0xff]
    %v244 = vld [vmem:[#allocation8 + $0x28] sm:$0xff]
    %v245 = vld [vmem:[#allocation8 + $0x30] sm:$0xff]
    %v246 = vld [vmem:[#allocation8 + $0x38] sm:$0xff]
    %v247 = vld [vmem:[#allocation8 + $0x40] sm:$0xff]
    %v248 = vld [vmem:[#allocation8 + $0x48] sm:$0xff]
    %v249 = vld [vmem:[#allocation8 + $0x50] sm:$0xff]
    %v250 = vld [vmem:[#allocation8 + $0x58] sm:$0xff]
    %v251 = vld [vmem:[#allocation8 + $0x60] sm:$0xff]
    %v252 = vld [vmem:[#allocation8 + $0x68] sm:$0xff]
    %v253 = vld [vmem:[#allocation8 + $0x70] sm:$0xff]
    %v254 = vld [vmem:[#allocation8 + $0x78] sm:$0xff]
    %v255 = vld [vmem:[#allocation8 + $0x80] sm:$0xff]
    %v256 = vld [vmem:[#allocation8 + $0x88] sm:$0xff]
    %v257 = vld [vmem:[#allocation8 + $0x90] sm:$0xff]
    %v258 = vld [vmem:[#allocation8 + $0x98] sm:$0xff]
    %v259 = vld [vmem:[#allocation8 + $0xa0] sm:$0xff]
    %v260 = vld [vmem:[#allocation8 + $0xa8] sm:$0xff]
    %v261 = vld [vmem:[#allocation8 + $0xb0] sm:$0xff]
    %v262 = vld [vmem:[#allocation8 + $0xb8] sm:$0xff]
    %v263 = vld [vmem:[#allocation8 + $0xc0] sm:$0xff]
    %v264 = vld [vmem:[#allocation8 + $0xc8] sm:$0xff]
    %v265 = vld [vmem:[#allocation8 + $0xd0] sm:$0xff]
    %v266 = vld [vmem:[#allocation8 + $0xd8] sm:$0xff]
    %v267 = vld [vmem:[#allocation8 + $0xe0] sm:$0xff]
    %v268 = vld [vmem:[#allocation8 + $0xe8] sm:$0xff]
    %v269 = vld [vmem:[#allocation8 + $0xf0] sm:$0xff]
    %v270 = vld [vmem:[#allocation8 + $0xf8] sm:$0xff]
    %v271 = vld [vmem:[#allocation8 + $0x100] sm:$0xff]
    %v272 = vld [vmem:[#allocation8 + $0x108] sm:$0xff]
    %v273 = vld [vmem:[#allocation8 + $0x110] sm:$0xff]
    %v274 = vld [vmem:[#allocation8 + $0x118] sm:$0xff]
    %v275 = vmul.f32 %v147, %v239
    %v276 = vmul.f32 %v146, %v240
    %v277 = vmul.f32 %v145, %v241
    %v278 = vmul.f32 %v144, %v242
    %v279 = vmul.f32 %v160, %v243
    %v280 = vmul.f32 %v159, %v244
    %v281 = vmul.f32 %v158, %v245
    %v282 = vmul.f32 %v157, %v246
    %v283 = vmul.f32 %v173, %v247
    %v284 = vmul.f32 %v172, %v248
    %v285 = vmul.f32 %v171, %v249
    %v286 = vmul.f32 %v170, %v250
    %v287 = vmul.f32 %v186, %v251
    %v288 = vmul.f32 %v185, %v252
    %v289 = vmul.f32 %v184, %v253
    %v290 = vmul.f32 %v183, %v254
    %v291 = vmul.f32 %v112, %v255
    %v292 = vmul.f32 %v113, %v256
    %v293 = vmul.f32 %v131, %v257
    %v294 = vmul.f32 %v132, %v258
    %v295 = vmul.f32 %v198, %v259
    %v296 = vmul.f32 %v197, %v260
    %v297 = vmul.f32 %v196, %v261
    %v298 = vmul.f32 %v199, %v262
    %v299 = vmul.f32 %v211, %v263
    %v300 = vmul.f32 %v210, %v264
    %v301 = vmul.f32 %v209, %v265
    %v302 = vmul.f32 %v212, %v266
    %v303 = vmul.f32 %v224, %v267
    %v304 = vmul.f32 %v223, %v268
    %v305 = vmul.f32 %v222, %v269
    %v306 = vmul.f32 %v225, %v270
    %v307 = vmul.f32 %v237, %v271
    %v308 = vmul.f32 %v236, %v272
    %v309 = vmul.f32 %v235, %v273
    %v310 = vmul.f32 %v238, %v274
    %v311 = vld [vmem:[%s4] sm:$0xff]
    %v312 = vld [vmem:[%s4 + $0x8] sm:$0xff]
    %v313 = vld [vmem:[%s4 + $0x10] sm:$0xff]
    %v314 = vld [vmem:[%s4 + $0x18] sm:$0xff]
    %v315 = vld [vmem:[%s5] sm:$0xff]
    %v316 = vld [vmem:[%s5 + $0x8] sm:$0xff]
    %v317 = vld [vmem:[%s5 + $0x10] sm:$0xff]
    %v318 = vld [vmem:[%s5 + $0x18] sm:$0xff]
    %320 = vset.pattern.permute.xlu0 0
    %321 = vperm.xlu0 %320, %v315
    %v322 = vpop.permute.xlu0 %321
    %325 = vset.pattern.permute.xlu0 0
    %326 = vperm.xlu0 %325, %v316
    %v327 = vpop.permute.xlu0 %326
    %330 = vset.pattern.permute.xlu0 0
    %331 = vperm.xlu0 %330, %v317
    %v332 = vpop.permute.xlu0 %331
    %335 = vset.pattern.permute.xlu0 0
    %336 = vperm.xlu0 %335, %v318
    %v337 = vpop.permute.xlu0 %336
    %vm339 = vcmask 588800
    %v341 = vsel %vm339, %v311, 0
    %v344 = vsel %vm339, %v312, 0
    %v347 = vsel %vm339, %v313, 0
    %v350 = vsel %vm339, %v314, 0
    %352 = vmatpush.msra.mxu0 0.0
    %353 = vmatpush.msra.mxu0 0.0
    %354 = vmatpush.msra.mxu0 0.0
    %355 = vmatpush.msra.mxu0 0.0
    %356 = vmatpush.msra.mxu0 0.0
    %357 = vmatpush.msra.mxu0 0.0
    %358 = vmatpush.msra.mxu0 0.0
    %359 = vmatpush.msra.mxu0 %v307
    %360 = vmatpush.msra.mxu0 %v303
    %361 = vmatpush.msra.mxu0 %v299
    %362 = vmatpush.msra.mxu0 %v295
    %363 = vmatpush.msra.mxu0 %v291
    %364 = vmatpush.msra.mxu0 %v287
    %365 = vmatpush.msra.mxu0 %v283
    %366 = vmatpush.msra.mxu0 %v279
    %367 = vmatpush.msra.mxu0 %v275
    %368 = vmatmul.f32.gmra.mxu0 %v341
    %v369 = vpop.f32.mrf.mxu0
    %v370 = vadd.f32 %v322, %v369
    %371 = vmatmul.f32.gmra.mxu0 %v344
    %v372 = vpop.f32.mrf.mxu0
    %v373 = vadd.f32 %v327, %v372
    %374 = vmatmul.f32.gmra.mxu0 %v347
    %v375 = vpop.f32.mrf.mxu0
    %v376 = vadd.f32 %v332, %v375
    %377 = vmatmul.f32.gmra.mxu0 %v350
    %v378 = vpop.f32.mrf.mxu0
    %v379 = vadd.f32 %v337, %v378
    %380 = vdwg.mxu0
    %381 = vmatpush.msra.mxu0 0.0
    %382 = vmatpush.msra.mxu0 0.0
    %383 = vmatpush.msra.mxu0 0.0
    %384 = vmatpush.msra.mxu0 0.0
    %385 = vmatpush.msra.mxu0 0.0
    %386 = vmatpush.msra.mxu0 0.0
    %387 = vmatpush.msra.mxu0 0.0
    %388 = vmatpush.msra.mxu0 %v308
    %389 = vmatpush.msra.mxu0 %v304
    %390 = vmatpush.msra.mxu0 %v300
    %391 = vmatpush.msra.mxu0 %v296
    %392 = vmatpush.msra.mxu0 %v292
    %393 = vmatpush.msra.mxu0 %v288
    %394 = vmatpush.msra.mxu0 %v284
    %395 = vmatpush.msra.mxu0 %v280
    %396 = vmatpush.msra.mxu0 %v276
    %397 = vmatmul.f32.gmra.mxu0 %v341
    %v398 = vpop.f32.mrf.mxu0
    %v399 = vadd.f32 %v322, %v398
    %400 = vmatmul.f32.gmra.mxu0 %v344
    %v401 = vpop.f32.mrf.mxu0
    %v402 = vadd.f32 %v327, %v401
    %403 = vmatmul.f32.gmra.mxu0 %v347
    %v404 = vpop.f32.mrf.mxu0
    %v405 = vadd.f32 %v332, %v404
    %406 = vmatmul.f32.gmra.mxu0 %v350
    %v407 = vpop.f32.mrf.mxu0
    %v408 = vadd.f32 %v337, %v407
    %409 = vdwg.mxu0
    %410 = vmatpush.msra.mxu0 0.0
    %411 = vmatpush.msra.mxu0 0.0
    %412 = vmatpush.msra.mxu0 0.0
    %413 = vmatpush.msra.mxu0 0.0
    %414 = vmatpush.msra.mxu0 0.0
    %415 = vmatpush.msra.mxu0 0.0
    %416 = vmatpush.msra.mxu0 0.0
    %417 = vmatpush.msra.mxu0 %v309
    %418 = vmatpush.msra.mxu0 %v305
    %419 = vmatpush.msra.mxu0 %v301
    %420 = vmatpush.msra.mxu0 %v297
    %421 = vmatpush.msra.mxu0 %v293
    %422 = vmatpush.msra.mxu0 %v289
    %423 = vmatpush.msra.mxu0 %v285
    %424 = vmatpush.msra.mxu0 %v281
    %425 = vmatpush.msra.mxu0 %v277
    %426 = vmatmul.f32.gmra.mxu0 %v341
    %v427 = vpop.f32.mrf.mxu0
    %v428 = vadd.f32 %v322, %v427
    %429 = vmatmul.f32.gmra.mxu0 %v344
    %v430 = vpop.f32.mrf.mxu0
    %v431 = vadd.f32 %v327, %v430
    %432 = vmatmul.f32.gmra.mxu0 %v347
    %v433 = vpop.f32.mrf.mxu0
    %v434 = vadd.f32 %v332, %v433
    %435 = vmatmul.f32.gmra.mxu0 %v350
    %v436 = vpop.f32.mrf.mxu0
    %v437 = vadd.f32 %v337, %v436
    %438 = vdwg.mxu0
    %439 = vmatpush.msra.mxu0 0.0
    %440 = vmatpush.msra.mxu0 0.0
    %441 = vmatpush.msra.mxu0 0.0
    %442 = vmatpush.msra.mxu0 0.0
    %443 = vmatpush.msra.mxu0 0.0
    %444 = vmatpush.msra.mxu0 0.0
    %445 = vmatpush.msra.mxu0 0.0
    %446 = vmatpush.msra.mxu0 %v310
    %447 = vmatpush.msra.mxu0 %v306
    %448 = vmatpush.msra.mxu0 %v302
    %449 = vmatpush.msra.mxu0 %v298
    %450 = vmatpush.msra.mxu0 %v294
    %451 = vmatpush.msra.mxu0 %v290
    %452 = vmatpush.msra.mxu0 %v286
    %453 = vmatpush.msra.mxu0 %v282
    %454 = vmatpush.msra.mxu0 %v278
    %455 = vmatmul.f32.gmra.mxu0 %v341
    %v456 = vpop.f32.mrf.mxu0
    %v457 = vadd.f32 %v322, %v456
    %458 = vmatmul.f32.gmra.mxu0 %v344
    %v459 = vpop.f32.mrf.mxu0
    %v460 = vadd.f32 %v327, %v459
    %461 = vmatmul.f32.gmra.mxu0 %v347
    %v462 = vpop.f32.mrf.mxu0
    %v463 = vadd.f32 %v332, %v462
    %464 = vmatmul.f32.gmra.mxu0 %v350
    %v465 = vpop.f32.mrf.mxu0
    %v466 = vadd.f32 %v337, %v465
    %467 = vdwg.mxu0
    %v468 = vmax.f32 %v370, 0.0
    %v469 = vmax.f32 %v399, 0.0
    %v470 = vmax.f32 %v428, 0.0
    %v471 = vmax.f32 %v457, 0.0
    %v472 = vmax.f32 %v373, 0.0
    %v473 = vmax.f32 %v402, 0.0
    %v474 = vmax.f32 %v431, 0.0
    %v475 = vmax.f32 %v460, 0.0
    %v476 = vmax.f32 %v376, 0.0
    %v477 = vmax.f32 %v405, 0.0
    %v478 = vmax.f32 %v434, 0.0
    %v479 = vmax.f32 %v463, 0.0
    %v480 = vmax.f32 %v379, 0.0
    %v481 = vmax.f32 %v408, 0.0
    %v482 = vmax.f32 %v437, 0.0
    %v483 = vmax.f32 %v466, 0.0
    %v484 = vld [vmem:[%s6] sm:$0xff]
    %v485 = vld [vmem:[%s7] sm:$0xff]
    %487 = vset.pattern.permute.xlu0 0
    %488 = vperm.xlu0 %487, %v485
    %v489 = vpop.permute.xlu0 %488
    %vm491 = vcmask 261120
    %v493 = vsel %vm491, %v484, 0
    %495 = vmatpush.msra.mxu0 0.0
    %496 = vmatpush.msra.mxu0 0.0
    %497 = vmatpush.msra.mxu0 0.0
    %498 = vmatpush.msra.mxu0 0.0
    %499 = vmatpush.msra.mxu0 0.0
    %500 = vmatpush.msra.mxu0 0.0
    %501 = vmatpush.msra.mxu0 0.0
    %502 = vmatpush.msra.mxu0 0.0
    %503 = vmatpush.msra.mxu0 0.0
    %504 = vmatpush.msra.mxu0 0.0
    %505 = vmatpush.msra.mxu0 0.0
    %506 = vmatpush.msra.mxu0 0.0
    %507 = vmatpush.msra.mxu0 %v480
    %508 = vmatpush.msra.mxu0 %v476
    %509 = vmatpush.msra.mxu0 %v472
    %510 = vmatpush.msra.mxu0 %v468
    %511 = vmatmul.f32.gmra.mxu0 %v493
    %v512 = vpop.f32.mrf.mxu0
    %v513 = vadd.f32 %v489, %v512
    %514 = vdwg.mxu0
    %515 = vmatpush.msra.mxu0 0.0
    %516 = vmatpush.msra.mxu0 0.0
    %517 = vmatpush.msra.mxu0 0.0
    %518 = vmatpush.msra.mxu0 0.0
    %519 = vmatpush.msra.mxu0 0.0
    %520 = vmatpush.msra.mxu0 0.0
    %521 = vmatpush.msra.mxu0 0.0
    %522 = vmatpush.msra.mxu0 0.0
    %523 = vmatpush.msra.mxu0 0.0
    %524 = vmatpush.msra.mxu0 0.0
    %525 = vmatpush.msra.mxu0 0.0
    %526 = vmatpush.msra.mxu0 0.0
    %527 = vmatpush.msra.mxu0 %v481
    %528 = vmatpush.msra.mxu0 %v477
    %529 = vmatpush.msra.mxu0 %v473
    %530 = vmatpush.msra.mxu0 %v469
    %531 = vmatmul.f32.gmra.mxu0 %v493
    %v532 = vpop.f32.mrf.mxu0
    %v533 = vadd.f32 %v489, %v532
    %534 = vdwg.mxu0
    %535 = vmatpush.msra.mxu0 0.0
    %536 = vmatpush.msra.mxu0 0.0
    %537 = vmatpush.msra.mxu0 0.0
    %538 = vmatpush.msra.mxu0 0.0
    %539 = vmatpush.msra.mxu0 0.0
    %540 = vmatpush.msra.mxu0 0.0
    %541 = vmatpush.msra.mxu0 0.0
    %542 = vmatpush.msra.mxu0 0.0
    %543 = vmatpush.msra.mxu0 0.0
    %544 = vmatpush.msra.mxu0 0.0
    %545 = vmatpush.msra.mxu0 0.0
    %546 = vmatpush.msra.mxu0 0.0
    %547 = vmatpush.msra.mxu0 %v482
    %548 = vmatpush.msra.mxu0 %v478
    %549 = vmatpush.msra.mxu0 %v474
    %550 = vmatpush.msra.mxu0 %v470
    %551 = vmatmul.f32.gmra.mxu0 %v493
    %v552 = vpop.f32.mrf.mxu0
    %v553 = vadd.f32 %v489, %v552
    %554 = vdwg.mxu0
    %555 = vmatpush.msra.mxu0 0.0
    %556 = vmatpush.msra.mxu0 0.0
    %557 = vmatpush.msra.mxu0 0.0
    %558 = vmatpush.msra.mxu0 0.0
    %559 = vmatpush.msra.mxu0 0.0
    %560 = vmatpush.msra.mxu0 0.0
    %561 = vmatpush.msra.mxu0 0.0
    %562 = vmatpush.msra.mxu0 0.0
    %563 = vmatpush.msra.mxu0 0.0
    %564 = vmatpush.msra.mxu0 0.0
    %565 = vmatpush.msra.mxu0 0.0
    %566 = vmatpush.msra.mxu0 0.0
    %567 = vmatpush.msra.mxu0 %v483
    %568 = vmatpush.msra.mxu0 %v479
    %569 = vmatpush.msra.mxu0 %v475
    %570 = vmatpush.msra.mxu0 %v471
    %571 = vmatmul.f32.gmra.mxu0 %v493
    %v572 = vpop.f32.mrf.mxu0
    %v573 = vadd.f32 %v489, %v572
    %574 = vdwg.mxu0
    %v575 = vxor.u32 %v513, 2147483648
    %v576 = vxor.u32 %v533, 2147483648
    %v577 = vxor.u32 %v553, 2147483648
    %v578 = vxor.u32 %v573, 2147483648
    %v579 = vmul.f32 %v575, 1.442695
    %v580 = vpow.pop %v579
    %v581 = vmul.f32 %v576, 1.442695
    %v582 = vpow.pop %v581
    %v583 = vmul.f32 %v577, 1.442695
    %v584 = vpow.pop %v583
    %v585 = vmul.f32 %v578, 1.442695
    %v586 = vpow.pop %v585
    %v587 = vadd.f32 %v580, 1.0
    %v588 = vadd.f32 %v582, 1.0
    %v589 = vadd.f32 %v584, 1.0
    %v590 = vadd.f32 %v586, 1.0
    %v591 = vrcp.pop %v587
    %v592 = vmul.f32 %v587, %v591
    %v593 = vsub.f32 1.0, %v592
    %v594 = vmul.f32 %v591, %v593
    %v595 = vadd.f32 %v591, %v594
    %vm596 = vweird.f32 %v587
    %vm597 = vweird.f32 %v591
    %vm598 = vmor %vm596, %vm597
    %v599 = vsel %vm598, %v591, %v595
    %v600 = vand.u32 2147483647, %v587
    %vm601 = vcmp.eq.f32.partialorder %v600, 8.507059e+37
    %v602 = vand.u32 %v587, 2147483648
    %v603 = vor.u32 1.1754944e-38, %v602
    %v604 = vsel %vm601, %v603, %v599
    %v605 = vmul.f32 1.0, %v604
    %v606 = vrcp.pop %v588
    %v607 = vmul.f32 %v588, %v606
    %v608 = vsub.f32 1.0, %v607
    %v609 = vmul.f32 %v606, %v608
    %v610 = vadd.f32 %v606, %v609
    %vm611 = vweird.f32 %v588
    %vm612 = vweird.f32 %v606
    %vm613 = vmor %vm611, %vm612
    %v614 = vsel %vm613, %v606, %v610
    %v615 = vand.u32 2147483647, %v588
    %vm616 = vcmp.eq.f32.partialorder %v615, 8.507059e+37
    %v617 = vand.u32 %v588, 2147483648
    %v618 = vor.u32 1.1754944e-38, %v617
    %v619 = vsel %vm616, %v618, %v614
    %v620 = vmul.f32 1.0, %v619
    %v621 = vrcp.pop %v589
    %v622 = vmul.f32 %v589, %v621
    %v623 = vsub.f32 1.0, %v622
    %v624 = vmul.f32 %v621, %v623
    %v625 = vadd.f32 %v621, %v624
    %vm626 = vweird.f32 %v589
    %vm627 = vweird.f32 %v621
    %vm628 = vmor %vm626, %vm627
    %v629 = vsel %vm628, %v621, %v625
    %v630 = vand.u32 2147483647, %v589
    %vm631 = vcmp.eq.f32.partialorder %v630, 8.507059e+37
    %v632 = vand.u32 %v589, 2147483648
    %v633 = vor.u32 1.1754944e-38, %v632
    %v634 = vsel %vm631, %v633, %v629
    %v635 = vmul.f32 1.0, %v634
    %v636 = vrcp.pop %v590
    %v637 = vmul.f32 %v590, %v636
    %v638 = vsub.f32 1.0, %v637
    %v639 = vmul.f32 %v636, %v638
    %v640 = vadd.f32 %v636, %v639
    %vm641 = vweird.f32 %v590
    %vm642 = vweird.f32 %v636
    %vm643 = vmor %vm641, %vm642
    %v644 = vsel %vm643, %v636, %v640
    %v645 = vand.u32 2147483647, %v590
    %vm646 = vcmp.eq.f32.partialorder %v645, 8.507059e+37
    %v647 = vand.u32 %v590, 2147483648
    %v648 = vor.u32 1.1754944e-38, %v647
    %v649 = vsel %vm646, %v648, %v644
    %v650 = vmul.f32 1.0, %v649
    %v651 = vmul.f32 %v605, 2.0
    %v652 = vmul.f32 %v620, 2.0
    %v653 = vmul.f32 %v635, 2.0
    %v654 = vmul.f32 %v650, 2.0
    %v655 = vsub.f32 %v651, 1.0
    %v656 = vsub.f32 %v652, 1.0
    %v657 = vsub.f32 %v653, 1.0
    %v658 = vsub.f32 %v654, 1.0
    %v659 = vld [vmem:[#allocation7] sm:$0xff]
    %s660 = scalar_lea.vmem [#allocation7], 8
    %v661 = vld [vmem:[%s660] sm:$0xff]
    %663 = vst [vmem:[#allocation1] ss:$2 sm:$0xff] %v659
    %v664 = vld.sshfl [vmem:[#allocation1] sm:$0xff pattern:$0x75316420]
    %v665 = vld.sshfl [vmem:[#allocation1 + $0x8] sm:$0xff pattern:$0x75316420]
    %669 = vst [vmem:[#allocation1] ss:$2 sm:$0xff] %v661
    %v670 = vld.sshfl [vmem:[#allocation1] sm:$0xff pattern:$0x75316420]
    %v671 = vld.sshfl [vmem:[#allocation1 + $0x8] sm:$0xff pattern:$0x75316420]
    %v674 = vmul.f32 %v655, 1.442695
    %v675 = vpow.pop %v674
    %v676 = vmul.f32 %v656, 1.442695
    %v677 = vpow.pop %v676
    %v678 = vmul.f32 %v657, 1.442695
    %v679 = vpow.pop %v678
    %v680 = vmul.f32 %v658, 1.442695
    %v681 = vpow.pop %v680
    %v686 = vrot.slane %v675, 4
    %v687 = vrot.slane %v677, 4
    %v688 = vrot.slane %v679, 4
    %v689 = vrot.slane %v681, 4
    %v694 = vmul.f32 %v664, %v686
    %v695 = vmul.f32 %v665, %v687
    %v696 = vmul.f32 %v670, %v688
    %v697 = vmul.f32 %v671, %v689
    %v698 = vadd.f32 %v694, %v513
    %v699 = vadd.f32 %v695, %v533
    %v700 = vadd.f32 %v696, %v553
    %v701 = vadd.f32 %v697, %v573
    %v704 = vrot.slane %v699, 4
    %v705 = vsel %vm111, %v698, %v704
    %707 = vst [vmem:[#allocation10] sm:$0xff] %v705
    %v710 = vrot.slane %v701, 4
    %v711 = vsel %vm111, %v700, %v710
    %s713 = scalar_lea.vmem [#allocation10], 8
    %714 = vst [vmem:[%s713] sm:$0xff] %v711
    %v719 = vrot.slane %v655, 4
    %v720 = vrot.slane %v656, 4
    %v721 = vrot.slane %v657, 4
    %v722 = vrot.slane %v658, 4
    %v727 = vsel %vm111, %v719, 0.0
    %v728 = vrot.slane %v727, 4
    %v729 = vadd.f32 %v727, %v728
    %v730 = vrot.slane %v729, 2
    %v731 = vadd.f32 %v729, %v730
    %v732 = vrot.slane %v731, 1
    %v733 = vadd.f32 %v731, %v732
    %v734 = vsel %vm111, %v720, 0.0
    %v735 = vrot.slane %v734, 4
    %v736 = vadd.f32 %v734, %v735
    %v737 = vrot.slane %v736, 2
    %v738 = vadd.f32 %v736, %v737
    %v739 = vrot.slane %v738, 1
    %v740 = vadd.f32 %v738, %v739
    %v741 = vsel %vm111, %v721, 0.0
    %v742 = vrot.slane %v741, 4
    %v743 = vadd.f32 %v741, %v742
    %v744 = vrot.slane %v743, 2
    %v745 = vadd.f32 %v743, %v744
    %v746 = vrot.slane %v745, 1
    %v747 = vadd.f32 %v745, %v746
    %v748 = vsel %vm111, %v722, 0.0
    %v749 = vrot.slane %v748, 4
    %v750 = vadd.f32 %v748, %v749
    %v751 = vrot.slane %v750, 2
    %v752 = vadd.f32 %v750, %v751
    %v753 = vrot.slane %v752, 1
    %v754 = vadd.f32 %v752, %v753
    %v759 = vrot.slane %v740, 7
    %v760 = vrot.slane %v747, 6
    %v761 = vrot.slane %v754, 5
    %vm762 = vcmask 1040384
    %v763 = vsel %vm762, %v733, %v759
    %vm764 = vcmask 1042434
    %v765 = vsel %vm764, %v760, %v761
    %vm766 = vcmask 1041408
    %v767 = vsel %vm766, %v763, %v765
    %v769 = vlaneseq
    %vm770 = vcmp.ge.s32.totalorder %v769, 0
    %vm771 = vcmp.lt.s32.totalorder %v769, 512
    %vm772 = vmand %vm770, %vm771
    %773 = vst.msk [vmem:[#allocation11] sm:$0xf] %vm772, %v767
    // Predicated region
    $region50: #{tpu_custom_call.1} parent=1 // pred_check
      _
    $region51: #{tpu_custom_call.1} parent=1 // pred_check_branch
      %775 = sbr.rel (0) target = $region53
    $region52: #{tpu_custom_call.1} parent=1 // pred_region
      %777 = vsyncadd [#allocation4], 0
      %s778 = sshll.u32 [#allocation10], 4
      %s779 = int_to_ptr.vmem [resolvable:$true] %s778
      %s780 = sshll.u32 %s8, 4
      %s781 = int_to_ptr.hbm [resolvable:$true] %s780
      %786 = dma.vmem_to_hbm [thread:$0]  %s779, 256, %s781, [#allocation4], 128, 128, 8
    $region53: #{tpu_custom_call.1} parent=1 // pred_fallthru
      _
    // Predicated region
    $region54: #{tpu_custom_call.1} parent=1 // pred_check
      _
    $region55: #{tpu_custom_call.1} parent=1 // pred_check_branch
      %788 = sbr.rel (0) target = $region57
    $region56: #{tpu_custom_call.1} parent=1 // pred_region
      %790 = vsyncadd [#allocation12], 0
      %s792 = sshll.u32 [#allocation11], 4
      %s793 = int_to_ptr.vmem [resolvable:$true] %s792
      %s794 = sshll.u32 %s9, 4
      %s795 = int_to_ptr.hbm [resolvable:$true] %s794
      %797 = dma.vmem_to_hbm [thread:$0]  %s793, 64, %s795, [#allocation12]
    $region57: #{tpu_custom_call.1} parent=1 // pred_fallthru
      _
    // Predicated region
    $region58: #{tpu_custom_call.1} parent=1 // pred_check
      _
    $region59: #{tpu_custom_call.1} parent=1 // pred_check_branch
      %799 = sbr.rel (0) target = $region61
    $region60: #{tpu_custom_call.1} parent=1 // pred_region
      %801 = dma.done [#allocation4], 256
    $region61: #{tpu_custom_call.1} parent=1 // pred_fallthru
      _
    // Predicated region
    $region62: #{tpu_custom_call.1} parent=1 // pred_check
      _
    $region63: #{tpu_custom_call.1} parent=1 // pred_check_branch
      %803 = sbr.rel (0) target = $region65
    $region64: #{tpu_custom_call.1} parent=1 // pred_region
      %805 = dma.done [#allocation12], 64
    $region65: #{tpu_custom_call.1} parent=1 // pred_fallthru
      _
    %806 = vsyncpa [#allocation3], 1
    %807 = vsyncpa [#allocation6], 1
    %808 = vsyncpa [#allocation9], 1
    %809 = vsyncpa [#allocation4], 1
    %810 = vsyncpa [#allocation12], 1

</llo_original>
